<compile_context>
chip_gen: v7x
topology: tpu7x:2x2x1
jax: 0.10.0
libtpu: 0.0.40
codegen_flags: <defaults>
</compile_context>

<pallas_src>
import jax
import jax.numpy as jnp
from jax.experimental import pallas as pl
from jax.experimental.pallas import tpu as pltpu


def _round_up(x, m):
    return ((x + m - 1) // m) * m


def dqn_kernel(x_ref, w1_ref, b1_ref, w2_ref, b2_ref, w3_ref, b3_ref, out_ref):
    # In-kernel f32 -> bf16 cast of the activation tile (VPU slot has huge
    # slack under the MXU; avoids a separate wrapper-side XLA cast pass).
    x = x_ref[...].astype(jnp.bfloat16)
    # Linear 1: (TB, n_obs)bf16 @ (n_obs, 128)bf16 -> f32 acc, f32 bias add
    h1 = jnp.dot(x, w1_ref[...], preferred_element_type=jnp.float32) + b1_ref[...]
    # Linear 2: (TB, 128) @ (128, 128)
    h2 = jnp.dot(h1.astype(jnp.bfloat16), w2_ref[...],
                 preferred_element_type=jnp.float32) + b2_ref[...]
    # Linear 3: (TB, 128) @ (128, n_actions) — written natively, no lane padding.
    out_ref[...] = (jnp.dot(h2.astype(jnp.bfloat16), w3_ref[...],
                            preferred_element_type=jnp.float32)
                    + b3_ref[...]).astype(out_ref.dtype)


def prepare_params(params):
    """One-time dtype prep: weights -> bf16 (MXU path), biases -> f32 (acc dtype).

    Call this when params are created/updated (e.g. after each optimizer step /
    target-net sync), NOT inside the forward, so the forward is a single fused
    pallas_call with no extra per-step XLA passes.
    """
    return {
        "w1": params["w1"].astype(jnp.bfloat16),
        "w2": params["w2"].astype(jnp.bfloat16),
        "w3": params["w3"].astype(jnp.bfloat16),
        "b1": params["b1"].astype(jnp.float32),
        "b2": params["b2"].astype(jnp.float32),
        "b3": params["b3"].astype(jnp.float32),
    }


def dqn_forward(x, prepared, *, batch_tile=2048):
    """x: (B, n_obs) float32; prepared: output of prepare_params.

    Weights stored as (in_features, out_features) = transpose of PyTorch's
    nn.Linear layout, so the kernel computes y = x @ W + b on the MXU.
    """
    B, n_obs = x.shape
    hidden = prepared["w1"].shape[1]
    n_actions = prepared["w3"].shape[1]

    # Batch tile: multiple of 8 sublanes, large enough to amortize per-step
    # overhead, capped so large batches still produce >= ~4 grid steps
    # (lets the "parallel" axis shard across the two TCs on v7x).
    TB = max(8, min(batch_tile, _round_up(-(-B // 4), 8)))
    grid = (pl.cdiv(B, TB),)  # ragged last block: Pallas masks OOB rows/stores

    # Constant index_map -> weights/biases stay resident in VMEM across all
    # batch tiles (DMA'd once). Block shape == full array dims, so the
    # sub-128 last dims (n_obs, n_actions) are legal.
    const = lambda arr: pl.BlockSpec(arr.shape, lambda i: (0,) * arr.ndim)

    flops = 2 * B * (n_obs * hidden + hidden * hidden + hidden * n_actions)
    bytes_accessed = (
        x.size * x.dtype.itemsize
        + sum(int(v.size) * v.dtype.itemsize for v in prepared.values())
        + B * n_actions * 4
    )

    return pl.pallas_call(
        dqn_kernel,
        out_shape=jax.ShapeDtypeStruct((B, n_actions), jnp.float32),
        grid=grid,
        in_specs=[
            pl.BlockSpec((TB, n_obs), lambda i: (i, 0)),   # streamed activation tile
            const(prepared["w1"]), const(prepared["b1"]),
            const(prepared["w2"]), const(prepared["b2"]),
            const(prepared["w3"]), const(prepared["b3"]),
        ],
        # Native (TB, n_actions) output block (last dim == full array dim):
        # no 128-lane padded slab, no wrapper slice, contiguous HBM writeback.
        out_specs=pl.BlockSpec((TB, n_actions), lambda i: (i, 0)),
        compiler_params=pltpu.CompilerParams(
            dimension_semantics=("parallel",)),
        cost_estimate=pl.CostEstimate(
            flops=flops, transcendentals=0, bytes_accessed=bytes_accessed),
    )(x, prepared["w1"], prepared["b1"], prepared["w2"], prepared["b2"],
      prepared["w3"], prepared["b3"])


def init_params(key, n_observations, n_actions, hidden=128):
    """Deterministic init mimicking nn.Linear's U(-1/sqrt(fan_in), +1/sqrt(fan_in))."""
    def linear(key, fan_in, fan_out):
        kw, kb = jax.random.split(key)
        bound = 1.0 / jnp.sqrt(fan_in)
        w = jax.random.uniform(kw, (fan_in, fan_out), jnp.float32, -bound, bound)
        b = jax.random.uniform(kb, (1, fan_out), jnp.float32, -bound, bound)
        return w, b

    k1, k2, k3 = jax.random.split(key, 3)
    w1, b1 = linear(k1, n_observations, hidden)
    w2, b2 = linear(k2, hidden, hidden)
    w3, b3 = linear(k3, hidden, n_actions)
    return {"w1": w1, "b1": b1, "w2": w2, "b2": b2, "w3": w3, "b3": b3}


def dqn_reference(x, prepared):
    """Pure-JAX reference mirroring the kernel's dtypes (bf16 matmuls, f32 acc)."""
    h1 = jnp.dot(x.astype(jnp.bfloat16), prepared["w1"],
                 preferred_element_type=jnp.float32) + prepared["b1"]
    h2 = jnp.dot(h1.astype(jnp.bfloat16), prepared["w2"],
                 preferred_element_type=jnp.float32) + prepared["b2"]
    return jnp.dot(h2.astype(jnp.bfloat16), prepared["w3"],
                   preferred_element_type=jnp.float32) + prepared["b3"]


if __name__ == "__main__":
    key = jax.random.PRNGKey(0)
    k_x, k_p = jax.random.split(key)

    batch = 16
    n_observations = 32
    n_actions = 8

    x = jax.random.normal(k_x, (batch, n_observations), jnp.float32)
    params = init_params(k_p, n_observations, n_actions)
    prepared = prepare_params(params)   # one-time cast, outside the forward

    # At this small batch TB resolves to 8 -> a 2-step grid, exercising the
    # pipelined/ragged-block path; large replay-buffer batches use bigger tiles.
    out = dqn_forward(x, prepared)
    out = jax.block_until_ready(out)

    ref = dqn_reference(x, prepared)
    assert out.shape == (batch, n_actions)
    assert jnp.allclose(out, ref, atol=1e-2, rtol=1e-2), "mismatch vs reference"

    print("KERNEL_OK")
</pallas_src>

<mosaic_0001>
module attributes {stable_mosaic.version = 11 : i64} {
  func.func @dqn_kernel(%arg0: i32, %arg1: memref<8x32xf32, #tpu.memory_space<vmem>>, %arg2: memref<32x128xbf16, #tpu.memory_space<vmem>>, %arg3: memref<1x128xf32, #tpu.memory_space<vmem>>, %arg4: memref<128x128xbf16, #tpu.memory_space<vmem>>, %arg5: memref<1x128xf32, #tpu.memory_space<vmem>>, %arg6: memref<128x8xbf16, #tpu.memory_space<vmem>>, %arg7: memref<1x8xf32, #tpu.memory_space<vmem>>, %arg8: memref<8x8xf32, #tpu.memory_space<vmem>>) attributes {dimension_semantics = [#tpu.dimension_semantics<parallel>], iteration_bounds = array<i64: 2>, scalar_prefetch = 0 : i64, scratch_operands = 0 : i64, tpu.core_type = #tpu.core_type<tc>, window_params = [{transform_indices = @transform_0, window_bounds = array<i64: 8, 32>}, {pipeline_mode = #tpu.pipeline_mode<synchronous>, transform_indices = @transform_1, window_bounds = array<i64: 32, 128>}, {pipeline_mode = #tpu.pipeline_mode<synchronous>, transform_indices = @transform_2, window_bounds = array<i64: 1, 128>}, {pipeline_mode = #tpu.pipeline_mode<synchronous>, transform_indices = @transform_3, window_bounds = array<i64: 128, 128>}, {pipeline_mode = #tpu.pipeline_mode<synchronous>, transform_indices = @transform_4, window_bounds = array<i64: 1, 128>}, {pipeline_mode = #tpu.pipeline_mode<synchronous>, transform_indices = @transform_5, window_bounds = array<i64: 128, 8>}, {pipeline_mode = #tpu.pipeline_mode<synchronous>, transform_indices = @transform_6, window_bounds = array<i64: 1, 8>}, {transform_indices = @transform_7, window_bounds = array<i64: 8, 8>}]} {
    %c0 = arith.constant 0 : index
    %c0_0 = arith.constant 0 : index
    %0 = vector.load %arg1[%c0, %c0_0] : memref<8x32xf32, #tpu.memory_space<vmem>>, vector<8x32xf32>
    %1 = arith.truncf %0 : vector<8x32xf32> to vector<8x32xbf16>
    %c0_1 = arith.constant 0 : index
    %c0_2 = arith.constant 0 : index
    %2 = vector.load %arg2[%c0_1, %c0_2] : memref<32x128xbf16, #tpu.memory_space<vmem>>, vector<32x128xbf16>
    %cst = arith.constant dense<0.000000e+00> : vector<8x128xf32>
    %3 = tpu.matmul %1, %2, %cst {dimension_numbers = #tpu.dot_dimension_numbers<[1], [0], [0], [1], [0, 0, 1, 1], [], []>} : vector<8x32xbf16>, vector<32x128xbf16>, vector<8x128xf32> -> vector<8x128xf32>
    %c0_3 = arith.constant 0 : index
    %c0_4 = arith.constant 0 : index
    %4 = vector.load %arg3[%c0_3, %c0_4] : memref<1x128xf32, #tpu.memory_space<vmem>>, vector<1x128xf32>
    %5 = vector.broadcast %4 : vector<1x128xf32> to vector<8x128xf32>
    %6 = arith.addf %3, %5 : vector<8x128xf32>
    %7 = arith.truncf %6 : vector<8x128xf32> to vector<8x128xbf16>
    %c0_5 = arith.constant 0 : index
    %c0_6 = arith.constant 0 : index
    %8 = vector.load %arg4[%c0_5, %c0_6] : memref<128x128xbf16, #tpu.memory_space<vmem>>, vector<128x128xbf16>
    %cst_7 = arith.constant dense<0.000000e+00> : vector<8x128xf32>
    %9 = tpu.matmul %7, %8, %cst_7 {dimension_numbers = #tpu.dot_dimension_numbers<[1], [0], [0], [1], [0, 0, 1, 1], [], []>} : vector<8x128xbf16>, vector<128x128xbf16>, vector<8x128xf32> -> vector<8x128xf32>
    %c0_8 = arith.constant 0 : index
    %c0_9 = arith.constant 0 : index
    %10 = vector.load %arg5[%c0_8, %c0_9] : memref<1x128xf32, #tpu.memory_space<vmem>>, vector<1x128xf32>
    %11 = vector.broadcast %10 : vector<1x128xf32> to vector<8x128xf32>
    %12 = arith.addf %9, %11 : vector<8x128xf32>
    %13 = arith.truncf %12 : vector<8x128xf32> to vector<8x128xbf16>
    %c0_10 = arith.constant 0 : index
    %c0_11 = arith.constant 0 : index
    %14 = vector.load %arg6[%c0_10, %c0_11] : memref<128x8xbf16, #tpu.memory_space<vmem>>, vector<128x8xbf16>
    %cst_12 = arith.constant dense<0.000000e+00> : vector<8x8xf32>
    %15 = tpu.matmul %13, %14, %cst_12 {dimension_numbers = #tpu.dot_dimension_numbers<[1], [0], [0], [1], [0, 0, 1, 1], [], []>} : vector<8x128xbf16>, vector<128x8xbf16>, vector<8x8xf32> -> vector<8x8xf32>
    %c0_13 = arith.constant 0 : index
    %c0_14 = arith.constant 0 : index
    %16 = vector.load %arg7[%c0_13, %c0_14] : memref<1x8xf32, #tpu.memory_space<vmem>>, vector<1x8xf32>
    %17 = vector.broadcast %16 : vector<1x8xf32> to vector<8x8xf32>
    %18 = arith.addf %15, %17 : vector<8x8xf32>
    %c0_15 = arith.constant 0 : index
    %c0_16 = arith.constant 0 : index
    %19 = vector.load %arg8[%c0_15, %c0_16] : memref<8x8xf32, #tpu.memory_space<vmem>>, vector<8x8xf32>
    tpu.vector_store %arg8[%c0_15, %c0_16], %18 {strides = array<i32>} : memref<8x8xf32, #tpu.memory_space<vmem>>, vector<8x8xf32>,
    return
  }
  func.func @transform_0(%arg0: i32) -> (i32, i32) {
    %c0_i32 = arith.constant 0 : i32
    %c0_i32_0 = arith.constant 0 : i32
    return %arg0, %c0_i32 : i32, i32
  }
  func.func @transform_1(%arg0: i32) -> (i32, i32) {
    %c0_i32 = arith.constant 0 : i32
    %c0_i32_0 = arith.constant 0 : i32
    %c0_i32_1 = arith.constant 0 : i32
    return %c0_i32, %c0_i32_0 : i32, i32
  }
  func.func @transform_2(%arg0: i32) -> (i32, i32) {
    %c0_i32 = arith.constant 0 : i32
    %c0_i32_0 = arith.constant 0 : i32
    %c0_i32_1 = arith.constant 0 : i32
    return %c0_i32, %c0_i32_0 : i32, i32
  }
  func.func @transform_3(%arg0: i32) -> (i32, i32) {
    %c0_i32 = arith.constant 0 : i32
    %c0_i32_0 = arith.constant 0 : i32
    %c0_i32_1 = arith.constant 0 : i32
    return %c0_i32, %c0_i32_0 : i32, i32
  }
  func.func @transform_4(%arg0: i32) -> (i32, i32) {
    %c0_i32 = arith.constant 0 : i32
    %c0_i32_0 = arith.constant 0 : i32
    %c0_i32_1 = arith.constant 0 : i32
    return %c0_i32, %c0_i32_0 : i32, i32
  }
  func.func @transform_5(%arg0: i32) -> (i32, i32) {
    %c0_i32 = arith.constant 0 : i32
    %c0_i32_0 = arith.constant 0 : i32
    %c0_i32_1 = arith.constant 0 : i32
    return %c0_i32, %c0_i32_0 : i32, i32
  }
  func.func @transform_6(%arg0: i32) -> (i32, i32) {
    %c0_i32 = arith.constant 0 : i32
    %c0_i32_0 = arith.constant 0 : i32
    %c0_i32_1 = arith.constant 0 : i32
    return %c0_i32, %c0_i32_0 : i32, i32
  }
  func.func @transform_7(%arg0: i32) -> (i32, i32) {
    %c0_i32 = arith.constant 0 : i32
    %c0_i32_0 = arith.constant 0 : i32
    return %arg0, %c0_i32 : i32, i32
  }
}

</mosaic_0001>

<llo_original>
// kernel: tpu_custom_call.1
$region0: #{tpu_custom_call.1}
  #allocation0 [shape = 'u32[]', space=smem, size = 0x4, offset = 0x4, fixed_abs, tag = 'smem constant byte address 0x4 - core index']
  #allocation1 [shape = 'u32[144,128]{1,0:T(1,128)}', space=vmem, size = 0x12000, scoped, tag = 'internal scratch']
  %s0 = inlined_call_operand.hbm [shape: f32[16,32], index: 0, kind: input, shape index: {}]
  %s1 = inlined_call_operand.hbm [shape: bf16[32,128], index: 1, kind: input, shape index: {}]
  %s2 = inlined_call_operand.vmem [shape: f32[1,128], index: 2, kind: input, shape index: {}]
  %s3 = inlined_call_operand.vmem [shape: bf16[128,128], index: 3, kind: input, shape index: {}]
  %s4 = inlined_call_operand.vmem [shape: f32[1,128], index: 4, kind: input, shape index: {}]
  %s5 = inlined_call_operand.vmem [shape: bf16[128,8], index: 5, kind: input, shape index: {}]
  %s6 = inlined_call_operand.vmem [shape: f32[1,8], index: 6, kind: input, shape index: {}]
  %s7 = inlined_call_operand.vmem [shape: f32[16,8], index: 7, kind: output, shape index: {}]
  %s8 = sld [smem:[#allocation0]]
  $region69: #{tpu_custom_call.1} parent=0
    _
  %s10 = ssub.s32 1, %s8
  %s11 = scalar_select 0, %s10, %s8
  $region1: #{tpu_custom_call.1} parent=0
    #allocation2 [shape = 'u8[8192]{0}', space=vmem, size = 0x2000, scoped, tag = 'input window, operand 0']
    #allocation3 [shape = 's32[2]{0}', space=sflag, size = 0x8, scoped, tag = 'scoped memory for tpu_custom_call.1']
    #allocation4 [shape = 'u8[8192]{0}', space=vmem, size = 0x2000, scoped, tag = 'input window, operand 1, single buffered']
    #allocation5 [shape = 's32[1]{0}', space=sflag, size = 0x4, scoped, tag = 'scoped memory for tpu_custom_call.1']
    %12 = vsyncpa [#allocation3], 0
    %s13 = scalar_lea.sflag [#allocation3], 1
    %14 = vsyncpa %s13, 0
    %15 = vsyncpa [#allocation5], 0
    loop: start=0, step=1, limit=4
    $region2: #{tpu_custom_call.1} parent=1 // loop_pre_header
      _
    $region3: #{tpu_custom_call.1} parent=1 // loop_header
      %s17 = sphi 0, %s21
      %p18 = scmp.ge.s32.totalorder %s17, 4
      %s27 = sphi 0, %s29
      %s30 = sphi 0, %s27
      %s31 = sphi 0, %s30
      %s47 = sphi 0, %s31
      %s51 = sphi 0, %s51
      %s53 = sphi 0, %s51
      %s54 = sphi 0, %s53
      %s68 = sphi 0, %s54
      %s72 = sphi 0, %s72
      %s74 = sphi 0, %s72
      %s75 = sphi 0, %s74
      %s89 = sphi 0, %s75
      %s93 = sphi 0, %s93
      %s95 = sphi 0, %s93
      %s96 = sphi 0, %s95
      %s110 = sphi 0, %s96
      %s114 = sphi 0, %s114
      %s116 = sphi 0, %s114
      %s117 = sphi 0, %s116
      %s131 = sphi 0, %s117
      %s135 = sphi 0, %s135
      %s137 = sphi 0, %s135
      %s138 = sphi 0, %s137
      %s152 = sphi 0, %s138
      %s156 = sphi 0, %s156
      %s158 = sphi 0, %s156
      %s159 = sphi 0, %s158
      %s173 = sphi 0, %s159
      %s179 = sphi 0, %s181
      %s182 = sphi 0, %s179
      %s183 = sphi 0, %s182
      %s199 = sphi 0, %s183
    $region4: #{tpu_custom_call.1} parent=1 // loop_header_branch
      %20 = sbr.rel (%p18) target = $region8
    $region5: #{tpu_custom_call.1} parent=1 // loop_body
      %s22 = ssub.s32 %s17, 1
      %s23 = ssub.s32 %s17, 2
      %s24 = sadd.s32 %s17, 1
      %s25 = ssub.s32 %s17, %s24
      %p26 = scmp.eq.s32.totalorder %s25, 0
      %s28 = sadd.s32 %s27, 1
      %s29 = scalar_select %p26, %s27, %s28
      %p32 = pneg %p26
      %p33 = scmp.eq.s32.totalorder %s17, 1
      %p34 = por %p32, %p33
      %p35 = scmp.ne.s32.totalorder %s27, %s30
      %p36 = scmp.eq.s32.totalorder %s17, 0
      %p37 = por %p35, %p36
      %p38 = scmp.ne.s32.totalorder %s27, %s30
      %p39 = scmp.eq.s32.totalorder %s22, 1
      %p40 = por %p38, %p39
      %p41 = scmp.ne.s32.totalorder %s30, %s31
      %p42 = scmp.eq.s32.totalorder %s22, 0
      %p43 = por %p41, %p42
      %p44 = scmp.ne.s32.totalorder %s30, %s31
      %p45 = scmp.eq.s32.totalorder %s23, 1
      %p46 = por %p44, %p45
      %p48 = scmp.ne.s32.totalorder %s31, %s47
      %p49 = scmp.eq.s32.totalorder %s23, 0
      %p50 = por %p48, %p49
      %s52 = sadd.s32 %s51, 1
      %p55 = scmp.eq.s32.totalorder %s17, 1
      %p56 = scmp.ne.s32.totalorder %s51, %s53
      %p57 = scmp.eq.s32.totalorder %s17, 0
      %p58 = por %p56, %p57
      %p59 = scmp.ne.s32.totalorder %s51, %s53
      %p60 = scmp.eq.s32.totalorder %s22, 1
      %p61 = por %p59, %p60
      %p62 = scmp.ne.s32.totalorder %s53, %s54
      %p63 = scmp.eq.s32.totalorder %s22, 0
      %p64 = por %p62, %p63
      %p65 = scmp.ne.s32.totalorder %s53, %s54
      %p66 = scmp.eq.s32.totalorder %s23, 1
      %p67 = por %p65, %p66
      %p69 = scmp.ne.s32.totalorder %s54, %s68
      %p70 = scmp.eq.s32.totalorder %s23, 0
      %p71 = por %p69, %p70
      %s73 = sadd.s32 %s72, 1
      %p76 = scmp.eq.s32.totalorder %s17, 1
      %p77 = scmp.ne.s32.totalorder %s72, %s74
      %p78 = scmp.eq.s32.totalorder %s17, 0
      %p79 = por %p77, %p78
      %p80 = scmp.ne.s32.totalorder %s72, %s74
      %p81 = scmp.eq.s32.totalorder %s22, 1
      %p82 = por %p80, %p81
      %p83 = scmp.ne.s32.totalorder %s74, %s75
      %p84 = scmp.eq.s32.totalorder %s22, 0
      %p85 = por %p83, %p84
      %p86 = scmp.ne.s32.totalorder %s74, %s75
      %p87 = scmp.eq.s32.totalorder %s23, 1
      %p88 = por %p86, %p87
      %p90 = scmp.ne.s32.totalorder %s75, %s89
      %p91 = scmp.eq.s32.totalorder %s23, 0
      %p92 = por %p90, %p91
      %s94 = sadd.s32 %s93, 1
      %p97 = scmp.eq.s32.totalorder %s17, 1
      %p98 = scmp.ne.s32.totalorder %s93, %s95
      %p99 = scmp.eq.s32.totalorder %s17, 0
      %p100 = por %p98, %p99
      %p101 = scmp.ne.s32.totalorder %s93, %s95
      %p102 = scmp.eq.s32.totalorder %s22, 1
      %p103 = por %p101, %p102
      %p104 = scmp.ne.s32.totalorder %s95, %s96
      %p105 = scmp.eq.s32.totalorder %s22, 0
      %p106 = por %p104, %p105
      %p107 = scmp.ne.s32.totalorder %s95, %s96
      %p108 = scmp.eq.s32.totalorder %s23, 1
      %p109 = por %p107, %p108
      %p111 = scmp.ne.s32.totalorder %s96, %s110
      %p112 = scmp.eq.s32.totalorder %s23, 0
      %p113 = por %p111, %p112
      %s115 = sadd.s32 %s114, 1
      %p118 = scmp.eq.s32.totalorder %s17, 1
      %p119 = scmp.ne.s32.totalorder %s114, %s116
      %p120 = scmp.eq.s32.totalorder %s17, 0
      %p121 = por %p119, %p120
      %p122 = scmp.ne.s32.totalorder %s114, %s116
      %p123 = scmp.eq.s32.totalorder %s22, 1
      %p124 = por %p122, %p123
      %p125 = scmp.ne.s32.totalorder %s116, %s117
      %p126 = scmp.eq.s32.totalorder %s22, 0
      %p127 = por %p125, %p126
      %p128 = scmp.ne.s32.totalorder %s116, %s117
      %p129 = scmp.eq.s32.totalorder %s23, 1
      %p130 = por %p128, %p129
      %p132 = scmp.ne.s32.totalorder %s117, %s131
      %p133 = scmp.eq.s32.totalorder %s23, 0
      %p134 = por %p132, %p133
      %s136 = sadd.s32 %s135, 1
      %p139 = scmp.eq.s32.totalorder %s17, 1
      %p140 = scmp.ne.s32.totalorder %s135, %s137
      %p141 = scmp.eq.s32.totalorder %s17, 0
      %p142 = por %p140, %p141
      %p143 = scmp.ne.s32.totalorder %s135, %s137
      %p144 = scmp.eq.s32.totalorder %s22, 1
      %p145 = por %p143, %p144
      %p146 = scmp.ne.s32.totalorder %s137, %s138
      %p147 = scmp.eq.s32.totalorder %s22, 0
      %p148 = por %p146, %p147
      %p149 = scmp.ne.s32.totalorder %s137, %s138
      %p150 = scmp.eq.s32.totalorder %s23, 1
      %p151 = por %p149, %p150
      %p153 = scmp.ne.s32.totalorder %s138, %s152
      %p154 = scmp.eq.s32.totalorder %s23, 0
      %p155 = por %p153, %p154
      %s157 = sadd.s32 %s156, 1
      %p160 = scmp.eq.s32.totalorder %s17, 1
      %p161 = scmp.ne.s32.totalorder %s156, %s158
      %p162 = scmp.eq.s32.totalorder %s17, 0
      %p163 = por %p161, %p162
      %p164 = scmp.ne.s32.totalorder %s156, %s158
      %p165 = scmp.eq.s32.totalorder %s22, 1
      %p166 = por %p164, %p165
      %p167 = scmp.ne.s32.totalorder %s158, %s159
      %p168 = scmp.eq.s32.totalorder %s22, 0
      %p169 = por %p167, %p168
      %p170 = scmp.ne.s32.totalorder %s158, %s159
      %p171 = scmp.eq.s32.totalorder %s23, 1
      %p172 = por %p170, %p171
      %p174 = scmp.ne.s32.totalorder %s159, %s173
      %p175 = scmp.eq.s32.totalorder %s23, 0
      %p176 = por %p174, %p175
      %s177 = ssub.s32 %s17, %s24
      %p178 = scmp.eq.s32.totalorder %s177, 0
      %s180 = sadd.s32 %s179, 1
      %s181 = scalar_select %p178, %s179, %s180
      %p184 = pneg %p178
      %p185 = scmp.eq.s32.totalorder %s17, 1
      %p186 = por %p184, %p185
      %p187 = scmp.ne.s32.totalorder %s179, %s182
      %p188 = scmp.eq.s32.totalorder %s17, 0
      %p189 = por %p187, %p188
      %p190 = scmp.ne.s32.totalorder %s179, %s182
      %p191 = scmp.eq.s32.totalorder %s22, 1
      %p192 = por %p190, %p191
      %p193 = scmp.ne.s32.totalorder %s182, %s183
      %p194 = scmp.eq.s32.totalorder %s22, 0
      %p195 = por %p193, %p194
      %p196 = scmp.ne.s32.totalorder %s182, %s183
      %p197 = scmp.eq.s32.totalorder %s23, 1
      %p198 = por %p196, %p197
      %p200 = scmp.ne.s32.totalorder %s183, %s199
      %p201 = scmp.eq.s32.totalorder %s23, 0
      %p202 = por %p200, %p201
      %p203 = scmp.le.s32.totalorder 1, %s17
      %p204 = scmp.lt.s32.totalorder %s17, 3
      %p205 = pnand %p203, %p204
      %p206 = pneg %p205
      // Predicated region
      $region9: #{tpu_custom_call.1} parent=5 // pred_check
        _
      $region10: #{tpu_custom_call.1} parent=5 // pred_check_branch
        %208 = sbr.rel (%p205) target = $region12
      $region11: #{tpu_custom_call.1} parent=5 // pred_region
        %s209 = ssub.s32 %s17, 1
        // Predicated region
        $region13: #{tpu_custom_call.1} parent=11 // pred_check
          %p210 = pneg %p64
        $region14: #{tpu_custom_call.1} parent=11 // pred_check_branch
          %212 = sbr.rel (%p210) target = $region16
        $region15: #{tpu_custom_call.1} parent=11 // pred_region
          %s214 = ssub.s32 256, 256
          %215 = vsyncadd [#allocation5], %s214
          %s216 = sshll.u32 [#allocation4], 4
          %s217 = int_to_ptr.vmem [resolvable:$true] %s216
          %222 = dma.hbm_to_vmem [thread:$0]  %s1, 256, %s217, [#allocation5], 64, 64, 4
        $region16: #{tpu_custom_call.1} parent=11 // pred_fallthru
          _
        // Predicated region
        $region17: #{tpu_custom_call.1} parent=11 // pred_check
          %p223 = pneg %p85
        $region18: #{tpu_custom_call.1} parent=11 // pred_check_branch
          %225 = sbr.rel (%p223) target = $region20
        $region19: #{tpu_custom_call.1} parent=11 // pred_region
          _
        $region20: #{tpu_custom_call.1} parent=11 // pred_fallthru
          _
        // Predicated region
        $region21: #{tpu_custom_call.1} parent=11 // pred_check
          %p226 = pneg %p106
        $region22: #{tpu_custom_call.1} parent=11 // pred_check_branch
          %228 = sbr.rel (%p226) target = $region24
        $region23: #{tpu_custom_call.1} parent=11 // pred_region
          _
        $region24: #{tpu_custom_call.1} parent=11 // pred_fallthru
          _
        // Predicated region
        $region25: #{tpu_custom_call.1} parent=11 // pred_check
          %p229 = pneg %p127
        $region26: #{tpu_custom_call.1} parent=11 // pred_check_branch
          %231 = sbr.rel (%p229) target = $region28
        $region27: #{tpu_custom_call.1} parent=11 // pred_region
          _
        $region28: #{tpu_custom_call.1} parent=11 // pred_fallthru
          _
        // Predicated region
        $region29: #{tpu_custom_call.1} parent=11 // pred_check
          %p232 = pneg %p148
        $region30: #{tpu_custom_call.1} parent=11 // pred_check_branch
          %234 = sbr.rel (%p232) target = $region32
        $region31: #{tpu_custom_call.1} parent=11 // pred_region
          _
        $region32: #{tpu_custom_call.1} parent=11 // pred_fallthru
          _
        // Predicated region
        $region33: #{tpu_custom_call.1} parent=11 // pred_check
          %p235 = pneg %p169
        $region34: #{tpu_custom_call.1} parent=11 // pred_check_branch
          %237 = sbr.rel (%p235) target = $region36
        $region35: #{tpu_custom_call.1} parent=11 // pred_region
          _
        $region36: #{tpu_custom_call.1} parent=11 // pred_fallthru
          _
      $region12: #{tpu_custom_call.1} parent=5 // pred_fallthru
        _
      %p238 = scmp.lt.s32.totalorder %s17, 2
      // Predicated region
      $region37: #{tpu_custom_call.1} parent=5 // pred_check
        %p239 = pneg %p238
      $region38: #{tpu_custom_call.1} parent=5 // pred_check_branch
        %241 = sbr.rel (%p239) target = $region40
      $region39: #{tpu_custom_call.1} parent=5 // pred_region
        // Predicated region
        $region41: #{tpu_custom_call.1} parent=39 // pred_check
          %p242 = pneg %p37
        $region42: #{tpu_custom_call.1} parent=39 // pred_check_branch
          %244 = sbr.rel (%p242) target = $region44
        $region43: #{tpu_custom_call.1} parent=39 // pred_region
          %s245 = sand.u32 %s27, 1
          %s246 = scalar_lea.sflag [#allocation3], %s245
          %s247 = sand.u32 %s27, 1
          %s248 = smul.addr %s247, 8
          %s249 = scalar_lea.vmem [#allocation2], %s248
          %s251 = ssub.s32 128, 128
          %252 = vsyncadd %s246, %s251
          %s253 = smul.addr %s17, 128
          %s254 = scalar_lea.hbm %s0, %s253
          %s256 = sshll.u32 %s249, 4
          %s257 = int_to_ptr.vmem [resolvable:$true] %s256
          %259 = dma.hbm_to_vmem [thread:$0]  %s254, 128, %s257, %s246
        $region44: #{tpu_custom_call.1} parent=39 // pred_fallthru
          _
      $region40: #{tpu_custom_call.1} parent=5 // pred_fallthru
        _
      %p260 = scmp.le.s32.totalorder 1, %s17
      %p261 = scmp.lt.s32.totalorder %s17, 3
      %p262 = pnand %p260, %p261
      %p263 = pneg %p262
      // Predicated region
      $region45: #{tpu_custom_call.1} parent=5 // pred_check
        _
      $region46: #{tpu_custom_call.1} parent=5 // pred_check_branch
        %265 = sbr.rel (%p262) target = $region48
      $region47: #{tpu_custom_call.1} parent=5 // pred_region
        %s266 = ssub.s32 %s17, 1
        %s267 = sand.u32 %s30, 1
        %s268 = scalar_lea.sflag [#allocation3], %s267
        %s269 = sand.u32 %s30, 1
        %s270 = smul.addr %s269, 8
        %s271 = scalar_lea.vmem [#allocation2], %s270
        // Predicated region
        $region49: #{tpu_custom_call.1} parent=47 // pred_check
          %p272 = pneg %p43
        $region50: #{tpu_custom_call.1} parent=47 // pred_check_branch
          %274 = sbr.rel (%p272) target = $region52
        $region51: #{tpu_custom_call.1} parent=47 // pred_region
          %275 = dma.done %s268, 128
        $region52: #{tpu_custom_call.1} parent=47 // pred_fallthru
          _
        // Predicated region
        $region53: #{tpu_custom_call.1} parent=47 // pred_check
          %p276 = pneg %p64
        $region54: #{tpu_custom_call.1} parent=47 // pred_check_branch
          %278 = sbr.rel (%p276) target = $region56
        $region55: #{tpu_custom_call.1} parent=47 // pred_region
          %279 = dma.done [#allocation5], 256
        $region56: #{tpu_custom_call.1} parent=47 // pred_fallthru
          _
        %s280 = sand.u32 %s30, 1
        %s281 = scalar_lea.sflag [#allocation3], %s280
        %s282 = sand.u32 %s30, 1
        %s283 = smul.addr %s282, 8
        %s284 = scalar_lea.vmem [#allocation2], %s283
        %p285 = pneg %p43
        %p286 = pneg %p40
        %p287 = pneg %p64
        %p288 = pneg %p61
        %p289 = pneg %p85
        %p290 = pneg %p82
        %p291 = pneg %p106
        %p292 = pneg %p103
        %p293 = pneg %p127
        %p294 = pneg %p124
        %p295 = pneg %p148
        %p296 = pneg %p145
        %p297 = pneg %p169
        %p298 = pneg %p166
        %p299 = pneg %p195
        %p300 = pneg %p192
        %p301 = scmp.lt.s32.totalorder %s22, 1
        %s302 = scalar_select %p301, %s22, 1
        %s303 = smul.addr %s302, 8
        %s304 = scalar_lea.vmem %s7, %s303
        %p305 = scmp.lt.s32.totalorder %s22, 1
        %s306 = scalar_select %p305, %s22, 1
        %s307 = smul.addr %s306, 8
        %s308 = scalar_lea.vmem %s7, %s307
        %v310 = vld [vmem:[%s271] sm:$0xff]
        %v311 = vpack.c.bf16 %v310, %v310
        %v312 = vld [vmem:[#allocation4] sm:$0xf]
        %v313 = vld [vmem:[#allocation4 + $0x4] sm:$0xf]
        %v314 = vld [vmem:[#allocation4 + $0x8] sm:$0xf]
        %v315 = vld [vmem:[#allocation4 + $0xc] sm:$0xf]
        %v316 = vld [vmem:[%s2] sm:$0x1]
        %v318 = vlaneseq
        %v319 = vshrl.u32 %v318, 7
        %v320 = vsub.s32 0, %v319
        %v321 = vrot.slane %v316, %v320
        %v327 = vunpack.c.l.b16 %v312
        %v328 = vunpack.c.l.b16 %v313
        %v329 = vunpack.c.l.b16 %v314
        %v330 = vunpack.c.l.b16 %v315
        %v331 = vpack.c.b16 %v328, %v327
        %v332 = vpack.c.b16 %v330, %v329
        %vm335 = vcmask 261120
        %v337 = vsel %vm335, %v311, 0
        %339 = vmatprep.subr.bf16.mxu0 0
        %340 = vmatpush1.bf16.msra.mxu0 %v331
        %341 = vmatprep.subr.bf16.mxu0 0
        %342 = vmatpush1.bf16.msra.mxu0 %v332
        %343 = vmatprep.subr.bf16.mxu0 0
        %344 = vmatpush1.bf16.msra.mxu0 0
        %345 = vmatprep.subr.bf16.mxu0 0
        %346 = vmatpush1.bf16.msra.mxu0 0
        %347 = vmatprep.subr.bf16.mxu0 0
        %348 = vmatpush1.bf16.msra.mxu0 0
        %349 = vmatprep.subr.bf16.mxu0 0
        %350 = vmatpush1.bf16.msra.mxu0 0
        %351 = vmatprep.subr.bf16.mxu0 0
        %352 = vmatpush1.bf16.msra.mxu0 0
        %353 = vmatprep.subr.bf16.mxu0 0
        %354 = vmatpush1.bf16.msra.mxu0 0
        %355 = vmatprep.subr.bf16.mxu0 0
        %356 = vmatpush1.bf16.msra.mxu0 0
        %357 = vmatprep.subr.bf16.mxu0 0
        %358 = vmatpush1.bf16.msra.mxu0 0
        %359 = vmatprep.subr.bf16.mxu0 0
        %360 = vmatpush1.bf16.msra.mxu0 0
        %361 = vmatprep.subr.bf16.mxu0 0
        %362 = vmatpush1.bf16.msra.mxu0 0
        %363 = vmatprep.subr.bf16.mxu0 0
        %364 = vmatpush1.bf16.msra.mxu0 0
        %365 = vmatprep.subr.bf16.mxu0 0
        %366 = vmatpush1.bf16.msra.mxu0 0
        %367 = vmatprep.subr.bf16.mxu0 0
        %368 = vmatpush1.bf16.msra.mxu0 0
        %369 = vmatprep.subr.bf16.mxu0 0
        %370 = vmatpush1.bf16.msra.mxu0 0
        %371 = vmatprep.mubr.bf16.mxu0 0
        %372 = vmatmul.mubr.bf16.gmra.mrb[0].mxu0 %v337
        %v373 = vpop.f32.mrb[0].mxu0
        %v374 = vadd.f32 %v321, %v373
        %v375 = vpop.f32.mrb[0].mxu0
        %v376 = vpop.f32.mrb[0].mxu0
        %v377 = vpop.f32.mrb[0].mxu0
        %378 = vdwg.mxu0
        %v379 = vpack.c.bf16 %v374, %v374
        %v380 = vld [vmem:[%s3] sm:$0xf]
        %v381 = vld [vmem:[%s3 + $0x4] sm:$0xf]
        %v382 = vld [vmem:[%s3 + $0x8] sm:$0xf]
        %v383 = vld [vmem:[%s3 + $0xc] sm:$0xf]
        %v384 = vld [vmem:[%s3 + $0x10] sm:$0xf]
        %v385 = vld [vmem:[%s3 + $0x14] sm:$0xf]
        %v386 = vld [vmem:[%s3 + $0x18] sm:$0xf]
        %v387 = vld [vmem:[%s3 + $0x1c] sm:$0xf]
        %v388 = vld [vmem:[%s3 + $0x20] sm:$0xf]
        %v389 = vld [vmem:[%s3 + $0x24] sm:$0xf]
        %v390 = vld [vmem:[%s3 + $0x28] sm:$0xf]
        %v391 = vld [vmem:[%s3 + $0x2c] sm:$0xf]
        %v392 = vld [vmem:[%s3 + $0x30] sm:$0xf]
        %v393 = vld [vmem:[%s3 + $0x34] sm:$0xf]
        %v394 = vld [vmem:[%s3 + $0x38] sm:$0xf]
        %v395 = vld [vmem:[%s3 + $0x3c] sm:$0xf]
        %v396 = vld [vmem:[%s4] sm:$0x1]
        %v398 = vlaneseq
        %v399 = vshrl.u32 %v398, 7
        %v400 = vsub.s32 0, %v399
        %v401 = vrot.slane %v396, %v400
        %v419 = vunpack.c.l.b16 %v380
        %v420 = vunpack.c.l.b16 %v381
        %v421 = vunpack.c.l.b16 %v382
        %v422 = vunpack.c.l.b16 %v383
        %v423 = vunpack.c.l.b16 %v384
        %v424 = vunpack.c.l.b16 %v385
        %v425 = vunpack.c.l.b16 %v386
        %v426 = vunpack.c.l.b16 %v387
        %v427 = vunpack.c.l.b16 %v388
        %v428 = vunpack.c.l.b16 %v389
        %v429 = vunpack.c.l.b16 %v390
        %v430 = vunpack.c.l.b16 %v391
        %v431 = vunpack.c.l.b16 %v392
        %v432 = vunpack.c.l.b16 %v393
        %v433 = vunpack.c.l.b16 %v394
        %v434 = vunpack.c.l.b16 %v395
        %v435 = vpack.c.b16 %v420, %v419
        %v436 = vpack.c.b16 %v422, %v421
        %v437 = vpack.c.b16 %v424, %v423
        %v438 = vpack.c.b16 %v426, %v425
        %v439 = vpack.c.b16 %v428, %v427
        %v440 = vpack.c.b16 %v430, %v429
        %v441 = vpack.c.b16 %v432, %v431
        %v442 = vpack.c.b16 %v434, %v433
        %451 = vmatprep.subr.bf16.mxu0 0
        %452 = vmatpush1.bf16.msra.mxu0 %v435
        %453 = vmatprep.subr.bf16.mxu0 0
        %454 = vmatpush1.bf16.msra.mxu0 %v436
        %455 = vmatprep.subr.bf16.mxu0 0
        %456 = vmatpush1.bf16.msra.mxu0 %v437
        %457 = vmatprep.subr.bf16.mxu0 0
        %458 = vmatpush1.bf16.msra.mxu0 %v438
        %459 = vmatprep.subr.bf16.mxu0 0
        %460 = vmatpush1.bf16.msra.mxu0 %v439
        %461 = vmatprep.subr.bf16.mxu0 0
        %462 = vmatpush1.bf16.msra.mxu0 %v440
        %463 = vmatprep.subr.bf16.mxu0 0
        %464 = vmatpush1.bf16.msra.mxu0 %v441
        %465 = vmatprep.subr.bf16.mxu0 0
        %466 = vmatpush1.bf16.msra.mxu0 %v442
        %467 = vmatprep.subr.bf16.mxu0 0
        %468 = vmatpush1.bf16.msra.mxu0 0
        %469 = vmatprep.subr.bf16.mxu0 0
        %470 = vmatpush1.bf16.msra.mxu0 0
        %471 = vmatprep.subr.bf16.mxu0 0
        %472 = vmatpush1.bf16.msra.mxu0 0
        %473 = vmatprep.subr.bf16.mxu0 0
        %474 = vmatpush1.bf16.msra.mxu0 0
        %475 = vmatprep.subr.bf16.mxu0 0
        %476 = vmatpush1.bf16.msra.mxu0 0
        %477 = vmatprep.subr.bf16.mxu0 0
        %478 = vmatpush1.bf16.msra.mxu0 0
        %479 = vmatprep.subr.bf16.mxu0 0
        %480 = vmatpush1.bf16.msra.mxu0 0
        %481 = vmatprep.subr.bf16.mxu0 0
        %482 = vmatpush1.bf16.msra.mxu0 0
        %483 = vmatprep.mubr.bf16.mxu0 0
        %484 = vmatmul.mubr.bf16.gmra.mrb[0].mxu0 %v379
        %v485 = vpop.f32.mrb[0].mxu0
        %v486 = vadd.f32 %v401, %v485
        %v487 = vpop.f32.mrb[0].mxu0
        %v488 = vpop.f32.mrb[0].mxu0
        %v489 = vpop.f32.mrb[0].mxu0
        %490 = vdwg.mxu0
        %v491 = vpack.c.bf16 %v486, %v486
        %v492 = vld [vmem:[%s5] sm:$0xf]
        %v493 = vld [vmem:[%s5 + $0x4] sm:$0xf]
        %v494 = vld [vmem:[%s5 + $0x8] sm:$0xf]
        %v495 = vld [vmem:[%s5 + $0xc] sm:$0xf]
        %v496 = vld [vmem:[%s5 + $0x10] sm:$0xf]
        %v497 = vld [vmem:[%s5 + $0x14] sm:$0xf]
        %v498 = vld [vmem:[%s5 + $0x18] sm:$0xf]
        %v499 = vld [vmem:[%s5 + $0x1c] sm:$0xf]
        %v500 = vld [vmem:[%s5 + $0x20] sm:$0xf]
        %v501 = vld [vmem:[%s5 + $0x24] sm:$0xf]
        %v502 = vld [vmem:[%s5 + $0x28] sm:$0xf]
        %v503 = vld [vmem:[%s5 + $0x2c] sm:$0xf]
        %v504 = vld [vmem:[%s5 + $0x30] sm:$0xf]
        %v505 = vld [vmem:[%s5 + $0x34] sm:$0xf]
        %v506 = vld [vmem:[%s5 + $0x38] sm:$0xf]
        %v507 = vld [vmem:[%s5 + $0x3c] sm:$0xf]
        %v508 = vld [vmem:[%s6] sm:$0x1]
        %v510 = vlaneseq
        %v511 = vshrl.u32 %v510, 7
        %v512 = vsub.s32 0, %v511
        %v513 = vrot.slane %v508, %v512
        %v531 = vunpack.c.l.b16 %v492
        %v532 = vunpack.c.l.b16 %v493
        %v533 = vunpack.c.l.b16 %v494
        %v534 = vunpack.c.l.b16 %v495
        %v535 = vunpack.c.l.b16 %v496
        %v536 = vunpack.c.l.b16 %v497
        %v537 = vunpack.c.l.b16 %v498
        %v538 = vunpack.c.l.b16 %v499
        %v539 = vunpack.c.l.b16 %v500
        %v540 = vunpack.c.l.b16 %v501
        %v541 = vunpack.c.l.b16 %v502
        %v542 = vunpack.c.l.b16 %v503
        %v543 = vunpack.c.l.b16 %v504
        %v544 = vunpack.c.l.b16 %v505
        %v545 = vunpack.c.l.b16 %v506
        %v546 = vunpack.c.l.b16 %v507
        %v547 = vpack.c.b16 %v532, %v531
        %v548 = vpack.c.b16 %v534, %v533
        %v549 = vpack.c.b16 %v536, %v535
        %v550 = vpack.c.b16 %v538, %v537
        %v551 = vpack.c.b16 %v540, %v539
        %v552 = vpack.c.b16 %v542, %v541
        %v553 = vpack.c.b16 %v544, %v543
        %v554 = vpack.c.b16 %v546, %v545
        %563 = vmatprep.subr.bf16.mxu0 0
        %564 = vmatpush1.bf16.msra.mxu0 %v547
        %565 = vmatprep.subr.bf16.mxu0 0
        %566 = vmatpush1.bf16.msra.mxu0 %v548
        %567 = vmatprep.subr.bf16.mxu0 0
        %568 = vmatpush1.bf16.msra.mxu0 %v549
        %569 = vmatprep.subr.bf16.mxu0 0
        %570 = vmatpush1.bf16.msra.mxu0 %v550
        %571 = vmatprep.subr.bf16.mxu0 0
        %572 = vmatpush1.bf16.msra.mxu0 %v551
        %573 = vmatprep.subr.bf16.mxu0 0
        %574 = vmatpush1.bf16.msra.mxu0 %v552
        %575 = vmatprep.subr.bf16.mxu0 0
        %576 = vmatpush1.bf16.msra.mxu0 %v553
        %577 = vmatprep.subr.bf16.mxu0 0
        %578 = vmatpush1.bf16.msra.mxu0 %v554
        %579 = vmatprep.subr.bf16.mxu0 0
        %580 = vmatpush1.bf16.msra.mxu0 0
        %581 = vmatprep.subr.bf16.mxu0 0
        %582 = vmatpush1.bf16.msra.mxu0 0
        %583 = vmatprep.subr.bf16.mxu0 0
        %584 = vmatpush1.bf16.msra.mxu0 0
        %585 = vmatprep.subr.bf16.mxu0 0
        %586 = vmatpush1.bf16.msra.mxu0 0
        %587 = vmatprep.subr.bf16.mxu0 0
        %588 = vmatpush1.bf16.msra.mxu0 0
        %589 = vmatprep.subr.bf16.mxu0 0
        %590 = vmatpush1.bf16.msra.mxu0 0
        %591 = vmatprep.subr.bf16.mxu0 0
        %592 = vmatpush1.bf16.msra.mxu0 0
        %593 = vmatprep.subr.bf16.mxu0 0
        %594 = vmatpush1.bf16.msra.mxu0 0
        %595 = vmatprep.mubr.bf16.mxu0 0
        %596 = vmatmul.mubr.bf16.gmra.mrb[0].mxu0 %v491
        %v597 = vpop.f32.mrb[0].mxu0
        %v598 = vadd.f32 %v513, %v597
        %v599 = vpop.f32.mrb[0].mxu0
        %v600 = vpop.f32.mrb[0].mxu0
        %v601 = vpop.f32.mrb[0].mxu0
        %602 = vdwg.mxu0
        %vm603 = vcmask 64512
        %604 = vst.msk [vmem:[%s308] sm:$0xff] %vm603, %v598
        %p605 = scmp.lt.s32.totalorder %s22, 1
        %s606 = scalar_select %p605, %s22, 1
        %s607 = smul.addr %s606, 8
        %s608 = scalar_lea.vmem %s7, %s607
        // Predicated region
        $region57: #{tpu_custom_call.1} parent=47 // pred_check
          %p609 = pneg %p192
        $region58: #{tpu_custom_call.1} parent=47 // pred_check_branch
          %611 = sbr.rel (%p609) target = $region60
        $region59: #{tpu_custom_call.1} parent=47 // pred_region
          _
        $region60: #{tpu_custom_call.1} parent=47 // pred_fallthru
          _
      $region48: #{tpu_custom_call.1} parent=5 // pred_fallthru
        _
      %p612 = scmp.le.s32.totalorder 2, %s17
      // Predicated region
      $region61: #{tpu_custom_call.1} parent=5 // pred_check
        %p613 = pneg %p612
      $region62: #{tpu_custom_call.1} parent=5 // pred_check_branch
        %615 = sbr.rel (%p613) target = $region64
      $region63: #{tpu_custom_call.1} parent=5 // pred_region
        %s616 = ssub.s32 %s17, 2
        // Predicated region
        $region65: #{tpu_custom_call.1} parent=63 // pred_check
          %p617 = pneg %p198
        $region66: #{tpu_custom_call.1} parent=63 // pred_check_branch
          %619 = sbr.rel (%p617) target = $region68
        $region67: #{tpu_custom_call.1} parent=63 // pred_region
          %p620 = scmp.lt.s32.totalorder %s23, 1
          %s621 = scalar_select %p620, %s23, 1
          %s622 = smul.addr %s621, 8
          %s623 = scalar_lea.vmem %s7, %s622
        $region68: #{tpu_custom_call.1} parent=63 // pred_fallthru
          _
      $region64: #{tpu_custom_call.1} parent=5 // pred_fallthru
        _
    $region6: #{tpu_custom_call.1} parent=1 // loop_footer
      %s21 = sadd.s32 1, %s17
    $region7: #{tpu_custom_call.1} parent=1 // loop_footer_branch
      %16 = sbr.rel target = $region3
    $region8: #{tpu_custom_call.1} parent=1 // loop_exit
      _
    %624 = vsyncpa [#allocation3], 1
    %s625 = scalar_lea.sflag [#allocation3], 1
    %626 = vsyncpa %s625, 1
    %627 = vsyncpa [#allocation5], 1

</llo_original>
